<compile_context>
chip_gen: v6e
topology: v6e:2x2x1
jax: 0.10.0
libtpu: 0.0.40
codegen_flags: <defaults>
</compile_context>

<pallas_src>
import jax
import jax.numpy as jnp
from jax.experimental import pallas as pl
from jax.experimental.pallas import tpu as pltpu


# ---------------------------------------------------------------------------
# Fused kernel: BN(scale/shift) + ReLU + AvgPool(3x3,s2) + Conv1x1 + bias
# One batch image per grid step; all operands are whole-block (full-dim) tiles.
# ---------------------------------------------------------------------------
def _transition_kernel(x_ref, scale_ref, shift_ref, pool_ref, w_ref, b_ref, o_ref):
    """
    x_ref:     (1, Cin, H*W)      input image, NCHW order flattened over (H,W)
    scale_ref: (Cin, 1)           BN scale  = gamma / sqrt(var + eps)
    shift_ref: (Cin, 1)           BN shift  = beta - mean * scale
    pool_ref:  (H*W, Ho*Wo)       constant combined avg-pool matrix (kron(PH,PW)/9)^T
    w_ref:     (Cout, Cin)        1x1 conv weight
    b_ref:     (Cout, 1)          conv bias
    o_ref:     (1, Cout, Ho*Wo)   output, NC(HoWo) order
    """
    # 1) BatchNorm (pre-folded affine) + ReLU -- lane-dense over H*W.
    y = jnp.maximum(x_ref[0] * scale_ref[...] + shift_ref[...], 0.0)      # (Cin, H*W)

    # 2) Full 2-D average pool as a single MXU matmul (pool-before-conv is exact).
    pooled = jnp.dot(y, pool_ref[...], preferred_element_type=jnp.float32)  # (Cin, Ho*Wo)

    # 3) 1x1 conv as a single matmul + bias, one whole-block store.
    out = jnp.dot(w_ref[...], pooled, preferred_element_type=jnp.float32) + b_ref[...]
    o_ref[0, :, :] = out.astype(o_ref.dtype)                               # (Cout, Ho*Wo)


# ---------------------------------------------------------------------------
# Wrapper: BN statistics (stable, centered), constant pool matrix, pallas_call
# ---------------------------------------------------------------------------
@jax.jit
def transition_block_2d(x_nchw, gamma, beta, conv_w, conv_b, eps=1e-5):
    N, Cin, H, W = x_nchw.shape
    if H < 3 or W < 3:
        raise ValueError(f"AvgPool2d(3,3,stride 2) needs H,W >= 3, got {(H, W)}")
    Cout = conv_w.shape[0]
    Ho = (H - 3) // 2 + 1
    Wo = (W - 3) // 2 + 1

    x = x_nchw.astype(jnp.float32)

    # Training-mode BatchNorm batch statistics (biased variance), centered form.
    # TODO(synk): this reduction stays as fused XLA ops (2 passes over x); fold
    # into a Pallas Welford reduction only if it shows up in profiles.
    mean = jnp.mean(x, axis=(0, 2, 3))
    var = jnp.mean(jnp.square(x - mean[None, :, None, None]), axis=(0, 2, 3))
    scale = gamma * jax.lax.rsqrt(var + eps)
    shift = beta - mean * scale

    # 1x1 conv weight (Cout, Cin, 1, 1) -> (Cout, Cin) matmul operand.
    w_mat = conv_w.reshape(Cout, Cin).astype(jnp.float32)

    # Constant combined AvgPool matrix: P[i*Wo+j, h*W+w] = PH[i,h]*PW[j,w]/9,
    # pooled_flat = y_flat @ P^T   (AvgPool2d(3,3; 2,2), no padding, floor mode).
    ih = jnp.arange(Ho, dtype=jnp.int32)[:, None]
    hh = jnp.arange(H, dtype=jnp.int32)[None, :]
    ph = jnp.where((hh >= 2 * ih) & (hh <= 2 * ih + 2), 1.0, 0.0)          # (Ho, H)
    jw = jnp.arange(Wo, dtype=jnp.int32)[:, None]
    ww = jnp.arange(W, dtype=jnp.int32)[None, :]
    pw = jnp.where((ww >= 2 * jw) & (ww <= 2 * jw + 2), 1.0, 0.0)          # (Wo, W)
    pool_t = (jnp.kron(ph, pw) / 9.0).T.astype(jnp.float32)                # (H*W, Ho*Wo)

    # Free (contiguous) reshape: NCHW -> (N, Cin, H*W). No transpose, no HBM pass.
    x_flat = x.reshape(N, Cin, H * W)

    out_flat = pl.pallas_call(
        _transition_kernel,
        out_shape=jax.ShapeDtypeStruct((N, Cout, Ho * Wo), jnp.float32),
        grid_spec=pltpu.PrefetchScalarGridSpec(
            num_scalar_prefetch=0,
            grid=(N,),
            in_specs=[
                pl.BlockSpec((1, Cin, H * W), lambda n: (n, 0, 0)),
                pl.BlockSpec((Cin, 1), lambda n: (0, 0)),
                pl.BlockSpec((Cin, 1), lambda n: (0, 0)),
                pl.BlockSpec((H * W, Ho * Wo), lambda n: (0, 0)),
                pl.BlockSpec((Cout, Cin), lambda n: (0, 0)),
                pl.BlockSpec((Cout, 1), lambda n: (0, 0)),
            ],
            out_specs=pl.BlockSpec((1, Cout, Ho * Wo), lambda n: (n, 0, 0)),
        ),
        compiler_params=pltpu.CompilerParams(
            dimension_semantics=("parallel",),   # batch images across TensorCores (v7x)
        ),
    )(
        x_flat,
        scale.reshape(Cin, 1).astype(jnp.float32),
        shift.reshape(Cin, 1).astype(jnp.float32),
        pool_t,
        w_mat,
        conv_b.reshape(Cout, 1).astype(jnp.float32),
    )

    # Free (contiguous) reshape back to NCHW output layout.
    return out_flat.reshape(N, Cout, Ho, Wo)


# ---------------------------------------------------------------------------
# Pure-JAX reference (matches the PyTorch forward exactly, training-mode BN)
# ---------------------------------------------------------------------------
def _transition_reference(x, gamma, beta, conv_w, conv_b, eps=1e-5):
    mean = jnp.mean(x, axis=(0, 2, 3), keepdims=True)
    var = jnp.mean(jnp.square(x - mean), axis=(0, 2, 3), keepdims=True)
    y = (x - mean) / jnp.sqrt(var + eps) * gamma[None, :, None, None] + beta[None, :, None, None]
    y = jnp.maximum(y, 0.0)
    z = jnp.einsum("oc,nchw->nohw", conv_w[:, :, 0, 0], y) + conv_b[None, :, None, None]
    zp = jax.lax.reduce_window(
        z, 0.0, jax.lax.add,
        window_dimensions=(1, 1, 3, 3),
        window_strides=(1, 1, 2, 2),
        padding="VALID",
    ) / 9.0
    return zp


if __name__ == "__main__":
    key = jax.random.PRNGKey(0)
    kx, kw, kb, kg, kbe = jax.random.split(key, 5)

    # Small shapes consistent with the module: batch=2, in_channels=4, 16x16 spatial,
    # num_channels (conv output) = 8.
    N, Cin, H, W = 2, 4, 16, 16
    Cout = 8

    x = jax.random.normal(kx, (N, Cin, H, W), jnp.float32)
    conv_w = 0.1 * jax.random.normal(kw, (Cout, Cin, 1, 1), jnp.float32)
    conv_b = 0.1 * jax.random.normal(kb, (Cout,), jnp.float32)
    gamma = 1.0 + 0.1 * jax.random.normal(kg, (Cin,), jnp.float32)
    beta = 0.1 * jax.random.normal(kbe, (Cin,), jnp.float32)

    out = transition_block_2d(x, gamma, beta, conv_w, conv_b)
    out = jax.block_until_ready(out)

    Ho, Wo = (H - 3) // 2 + 1, (W - 3) // 2 + 1
    assert out.shape == (N, Cout, Ho, Wo), out.shape
    assert out.dtype == jnp.float32

    ref = _transition_reference(x, gamma, beta, conv_w, conv_b)
    max_err = float(jnp.max(jnp.abs(out - ref)))
    assert jnp.allclose(out, ref, rtol=2e-3, atol=2e-3), max_err

    print("KERNEL_OK")
</pallas_src>

<mosaic_0001>
module attributes {stable_mosaic.version = 11 : i64} {
  func.func @_transition_kernel(%arg0: i32, %arg1: memref<1x4x256xf32, #tpu.memory_space<vmem>>, %arg2: memref<4x1xf32, #tpu.memory_space<vmem>>, %arg3: memref<4x1xf32, #tpu.memory_space<vmem>>, %arg4: memref<256x49xf32, #tpu.memory_space<vmem>>, %arg5: memref<8x4xf32, #tpu.memory_space<vmem>>, %arg6: memref<8x1xf32, #tpu.memory_space<vmem>>, %arg7: memref<1x8x49xf32, #tpu.memory_space<vmem>>) attributes {dimension_semantics = [#tpu.dimension_semantics<parallel>], iteration_bounds = array<i64: 2>, scalar_prefetch = 0 : i64, scratch_operands = 0 : i64, tpu.core_type = #tpu.core_type<tc>, window_params = [{transform_indices = @transform_0, window_bounds = array<i64: 1, 4, 256>}, {pipeline_mode = #tpu.pipeline_mode<synchronous>, transform_indices = @transform_1, window_bounds = array<i64: 4, 1>}, {pipeline_mode = #tpu.pipeline_mode<synchronous>, transform_indices = @transform_2, window_bounds = array<i64: 4, 1>}, {pipeline_mode = #tpu.pipeline_mode<synchronous>, transform_indices = @transform_3, window_bounds = array<i64: 256, 49>}, {pipeline_mode = #tpu.pipeline_mode<synchronous>, transform_indices = @transform_4, window_bounds = array<i64: 8, 4>}, {pipeline_mode = #tpu.pipeline_mode<synchronous>, transform_indices = @transform_5, window_bounds = array<i64: 8, 1>}, {transform_indices = @transform_6, window_bounds = array<i64: 1, 8, 49>}]} {
    %c0 = arith.constant 0 : index
    %c0_0 = arith.constant 0 : index
    %c0_1 = arith.constant 0 : index
    %0 = vector.load %arg1[%c0, %c0_0, %c0_1] : memref<1x4x256xf32, #tpu.memory_space<vmem>>, vector<1x4x256xf32>
    %1 = vector.shape_cast %0 : vector<1x4x256xf32> to vector<4x256xf32>
    %c0_2 = arith.constant 0 : index
    %c0_3 = arith.constant 0 : index
    %2 = vector.load %arg2[%c0_2, %c0_3] : memref<4x1xf32, #tpu.memory_space<vmem>>, vector<4x1xf32>
    %3 = vector.broadcast %2 : vector<4x1xf32> to vector<4x256xf32>
    %4 = arith.mulf %1, %3 : vector<4x256xf32>
    %c0_4 = arith.constant 0 : index
    %c0_5 = arith.constant 0 : index
    %5 = vector.load %arg3[%c0_4, %c0_5] : memref<4x1xf32, #tpu.memory_space<vmem>>, vector<4x1xf32>
    %6 = vector.broadcast %5 : vector<4x1xf32> to vector<4x256xf32>
    %7 = arith.addf %4, %6 : vector<4x256xf32>
    %cst = arith.constant 0.000000e+00 : f32
    %8 = vector.broadcast %cst : f32 to vector<4x256xf32>
    %9 = arith.maximumf %7, %8 : vector<4x256xf32>
    %c0_6 = arith.constant 0 : index
    %c0_7 = arith.constant 0 : index
    %10 = vector.load %arg4[%c0_6, %c0_7] : memref<256x49xf32, #tpu.memory_space<vmem>>, vector<256x49xf32>
    %cst_8 = arith.constant dense<0.000000e+00> : vector<4x49xf32>
    %11 = tpu.matmul %9, %10, %cst_8 {dimension_numbers = #tpu.dot_dimension_numbers<[1], [0], [0], [1], [0, 0, 1, 1], [], []>} : vector<4x256xf32>, vector<256x49xf32>, vector<4x49xf32> -> vector<4x49xf32>
    %c0_9 = arith.constant 0 : index
    %c0_10 = arith.constant 0 : index
    %12 = vector.load %arg5[%c0_9, %c0_10] : memref<8x4xf32, #tpu.memory_space<vmem>>, vector<8x4xf32>
    %cst_11 = arith.constant dense<0.000000e+00> : vector<8x49xf32>
    %13 = tpu.matmul %12, %11, %cst_11 {dimension_numbers = #tpu.dot_dimension_numbers<[1], [0], [0], [1], [0, 0, 1, 1], [], []>} : vector<8x4xf32>, vector<4x49xf32>, vector<8x49xf32> -> vector<8x49xf32>
    %c0_12 = arith.constant 0 : index
    %c0_13 = arith.constant 0 : index
    %14 = vector.load %arg6[%c0_12, %c0_13] : memref<8x1xf32, #tpu.memory_space<vmem>>, vector<8x1xf32>
    %15 = vector.broadcast %14 : vector<8x1xf32> to vector<8x49xf32>
    %16 = arith.addf %13, %15 : vector<8x49xf32>
    %c0_14 = arith.constant 0 : index
    %c0_15 = arith.constant 0 : index
    %c0_16 = arith.constant 0 : index
    %17 = vector.load %arg7[%c0_14, %c0_15, %c0_16] : memref<1x8x49xf32, #tpu.memory_space<vmem>>, vector<1x8x49xf32>
    %18 = vector.shape_cast %17 : vector<1x8x49xf32> to vector<8x49xf32>
    %19 = vector.shape_cast %16 : vector<8x49xf32> to vector<1x8x49xf32>
    tpu.vector_store %arg7[%c0_14, %c0_15, %c0_16], %19 {strides = array<i32>} : memref<1x8x49xf32, #tpu.memory_space<vmem>>, vector<1x8x49xf32>,
    return
  }
  func.func @transform_0(%arg0: i32) -> (i32, i32, i32) {
    %c0_i32 = arith.constant 0 : i32
    %c0_i32_0 = arith.constant 0 : i32
    %c0_i32_1 = arith.constant 0 : i32
    return %arg0, %c0_i32, %c0_i32_0 : i32, i32, i32
  }
  func.func @transform_1(%arg0: i32) -> (i32, i32) {
    %c0_i32 = arith.constant 0 : i32
    %c0_i32_0 = arith.constant 0 : i32
    %c0_i32_1 = arith.constant 0 : i32
    return %c0_i32, %c0_i32_0 : i32, i32
  }
  func.func @transform_2(%arg0: i32) -> (i32, i32) {
    %c0_i32 = arith.constant 0 : i32
    %c0_i32_0 = arith.constant 0 : i32
    %c0_i32_1 = arith.constant 0 : i32
    return %c0_i32, %c0_i32_0 : i32, i32
  }
  func.func @transform_3(%arg0: i32) -> (i32, i32) {
    %c0_i32 = arith.constant 0 : i32
    %c0_i32_0 = arith.constant 0 : i32
    %c0_i32_1 = arith.constant 0 : i32
    return %c0_i32, %c0_i32_0 : i32, i32
  }
  func.func @transform_4(%arg0: i32) -> (i32, i32) {
    %c0_i32 = arith.constant 0 : i32
    %c0_i32_0 = arith.constant 0 : i32
    %c0_i32_1 = arith.constant 0 : i32
    return %c0_i32, %c0_i32_0 : i32, i32
  }
  func.func @transform_5(%arg0: i32) -> (i32, i32) {
    %c0_i32 = arith.constant 0 : i32
    %c0_i32_0 = arith.constant 0 : i32
    %c0_i32_1 = arith.constant 0 : i32
    return %c0_i32, %c0_i32_0 : i32, i32
  }
  func.func @transform_6(%arg0: i32) -> (i32, i32, i32) {
    %c0_i32 = arith.constant 0 : i32
    %c0_i32_0 = arith.constant 0 : i32
    %c0_i32_1 = arith.constant 0 : i32
    return %arg0, %c0_i32, %c0_i32_0 : i32, i32, i32
  }
}

</mosaic_0001>

<llo_original>
// kernel: transition_block_2d.1
$region0: #{transition_block_2d.1}
  #allocation0 [shape = 'u32[]', space=smem, size = 0x4, offset = 0x4, fixed_abs, tag = 'smem constant byte address 0x4 - core index']
  #allocation1 [shape = 'u32[144,128]{1,0:T(1,128)}', space=vmem, size = 0x12000, scoped, tag = 'internal scratch']
  %s0 = inlined_call_operand.vmem [shape: f32[2,4,256], index: 0, kind: input, shape index: {}]
  %s1 = inlined_call_operand.vmem [shape: f32[4,1], index: 1, kind: input, shape index: {}]
  %s2 = inlined_call_operand.vmem [shape: f32[4,1], index: 2, kind: input, shape index: {}]
  %s3 = inlined_call_operand.vmem [shape: f32[256,49], index: 3, kind: input, shape index: {}]
  %s4 = inlined_call_operand.vmem [shape: f32[8,4], index: 4, kind: input, shape index: {}]
  %s5 = inlined_call_operand.vmem [shape: f32[8,1], index: 5, kind: input, shape index: {}]
  %s6 = inlined_call_operand.vmem [shape: f32[2,8,49], index: 6, kind: output, shape index: {}]
  %s7 = sld [smem:[#allocation0]]
  $region57: #{transition_block_2d.1} parent=0
    _
  %s9 = ssub.s32 1, %s7
  %s10 = scalar_select 0, %s9, %s7
  loop: start=0, step=1, limit=4
  $region2: #{transition_block_2d.1} parent=0 // loop_pre_header
    _
  $region3: #{transition_block_2d.1} parent=0 // loop_header
    %s12 = sphi 0, %s16
    %p13 = scmp.ge.s32.totalorder %s12, 4
    %s22 = sphi 0, %s24
    %s25 = sphi 0, %s22
    %s26 = sphi 0, %s25
    %s42 = sphi 0, %s26
    %s46 = sphi 0, %s46
    %s48 = sphi 0, %s46
    %s49 = sphi 0, %s48
    %s63 = sphi 0, %s49
    %s67 = sphi 0, %s67
    %s69 = sphi 0, %s67
    %s70 = sphi 0, %s69
    %s84 = sphi 0, %s70
    %s88 = sphi 0, %s88
    %s90 = sphi 0, %s88
    %s91 = sphi 0, %s90
    %s105 = sphi 0, %s91
    %s109 = sphi 0, %s109
    %s111 = sphi 0, %s109
    %s112 = sphi 0, %s111
    %s126 = sphi 0, %s112
    %s130 = sphi 0, %s130
    %s132 = sphi 0, %s130
    %s133 = sphi 0, %s132
    %s147 = sphi 0, %s133
    %s153 = sphi 0, %s155
    %s156 = sphi 0, %s153
    %s157 = sphi 0, %s156
    %s173 = sphi 0, %s157
  $region4: #{transition_block_2d.1} parent=0 // loop_header_branch
    %15 = sbr.rel (%p13) target = $region8
  $region5: #{transition_block_2d.1} parent=0 // loop_body
    %s17 = ssub.s32 %s12, 1
    %s18 = ssub.s32 %s12, 2
    %s19 = sadd.s32 %s12, 1
    %s20 = ssub.s32 %s12, %s19
    %p21 = scmp.eq.s32.totalorder %s20, 0
    %s23 = sadd.s32 %s22, 1
    %s24 = scalar_select %p21, %s22, %s23
    %p27 = pneg %p21
    %p28 = scmp.eq.s32.totalorder %s12, 1
    %p29 = por %p27, %p28
    %p30 = scmp.ne.s32.totalorder %s22, %s25
    %p31 = scmp.eq.s32.totalorder %s12, 0
    %p32 = por %p30, %p31
    %p33 = scmp.ne.s32.totalorder %s22, %s25
    %p34 = scmp.eq.s32.totalorder %s17, 1
    %p35 = por %p33, %p34
    %p36 = scmp.ne.s32.totalorder %s25, %s26
    %p37 = scmp.eq.s32.totalorder %s17, 0
    %p38 = por %p36, %p37
    %p39 = scmp.ne.s32.totalorder %s25, %s26
    %p40 = scmp.eq.s32.totalorder %s18, 1
    %p41 = por %p39, %p40
    %p43 = scmp.ne.s32.totalorder %s26, %s42
    %p44 = scmp.eq.s32.totalorder %s18, 0
    %p45 = por %p43, %p44
    %s47 = sadd.s32 %s46, 1
    %p50 = scmp.eq.s32.totalorder %s12, 1
    %p51 = scmp.ne.s32.totalorder %s46, %s48
    %p52 = scmp.eq.s32.totalorder %s12, 0
    %p53 = por %p51, %p52
    %p54 = scmp.ne.s32.totalorder %s46, %s48
    %p55 = scmp.eq.s32.totalorder %s17, 1
    %p56 = por %p54, %p55
    %p57 = scmp.ne.s32.totalorder %s48, %s49
    %p58 = scmp.eq.s32.totalorder %s17, 0
    %p59 = por %p57, %p58
    %p60 = scmp.ne.s32.totalorder %s48, %s49
    %p61 = scmp.eq.s32.totalorder %s18, 1
    %p62 = por %p60, %p61
    %p64 = scmp.ne.s32.totalorder %s49, %s63
    %p65 = scmp.eq.s32.totalorder %s18, 0
    %p66 = por %p64, %p65
    %s68 = sadd.s32 %s67, 1
    %p71 = scmp.eq.s32.totalorder %s12, 1
    %p72 = scmp.ne.s32.totalorder %s67, %s69
    %p73 = scmp.eq.s32.totalorder %s12, 0
    %p74 = por %p72, %p73
    %p75 = scmp.ne.s32.totalorder %s67, %s69
    %p76 = scmp.eq.s32.totalorder %s17, 1
    %p77 = por %p75, %p76
    %p78 = scmp.ne.s32.totalorder %s69, %s70
    %p79 = scmp.eq.s32.totalorder %s17, 0
    %p80 = por %p78, %p79
    %p81 = scmp.ne.s32.totalorder %s69, %s70
    %p82 = scmp.eq.s32.totalorder %s18, 1
    %p83 = por %p81, %p82
    %p85 = scmp.ne.s32.totalorder %s70, %s84
    %p86 = scmp.eq.s32.totalorder %s18, 0
    %p87 = por %p85, %p86
    %s89 = sadd.s32 %s88, 1
    %p92 = scmp.eq.s32.totalorder %s12, 1
    %p93 = scmp.ne.s32.totalorder %s88, %s90
    %p94 = scmp.eq.s32.totalorder %s12, 0
    %p95 = por %p93, %p94
    %p96 = scmp.ne.s32.totalorder %s88, %s90
    %p97 = scmp.eq.s32.totalorder %s17, 1
    %p98 = por %p96, %p97
    %p99 = scmp.ne.s32.totalorder %s90, %s91
    %p100 = scmp.eq.s32.totalorder %s17, 0
    %p101 = por %p99, %p100
    %p102 = scmp.ne.s32.totalorder %s90, %s91
    %p103 = scmp.eq.s32.totalorder %s18, 1
    %p104 = por %p102, %p103
    %p106 = scmp.ne.s32.totalorder %s91, %s105
    %p107 = scmp.eq.s32.totalorder %s18, 0
    %p108 = por %p106, %p107
    %s110 = sadd.s32 %s109, 1
    %p113 = scmp.eq.s32.totalorder %s12, 1
    %p114 = scmp.ne.s32.totalorder %s109, %s111
    %p115 = scmp.eq.s32.totalorder %s12, 0
    %p116 = por %p114, %p115
    %p117 = scmp.ne.s32.totalorder %s109, %s111
    %p118 = scmp.eq.s32.totalorder %s17, 1
    %p119 = por %p117, %p118
    %p120 = scmp.ne.s32.totalorder %s111, %s112
    %p121 = scmp.eq.s32.totalorder %s17, 0
    %p122 = por %p120, %p121
    %p123 = scmp.ne.s32.totalorder %s111, %s112
    %p124 = scmp.eq.s32.totalorder %s18, 1
    %p125 = por %p123, %p124
    %p127 = scmp.ne.s32.totalorder %s112, %s126
    %p128 = scmp.eq.s32.totalorder %s18, 0
    %p129 = por %p127, %p128
    %s131 = sadd.s32 %s130, 1
    %p134 = scmp.eq.s32.totalorder %s12, 1
    %p135 = scmp.ne.s32.totalorder %s130, %s132
    %p136 = scmp.eq.s32.totalorder %s12, 0
    %p137 = por %p135, %p136
    %p138 = scmp.ne.s32.totalorder %s130, %s132
    %p139 = scmp.eq.s32.totalorder %s17, 1
    %p140 = por %p138, %p139
    %p141 = scmp.ne.s32.totalorder %s132, %s133
    %p142 = scmp.eq.s32.totalorder %s17, 0
    %p143 = por %p141, %p142
    %p144 = scmp.ne.s32.totalorder %s132, %s133
    %p145 = scmp.eq.s32.totalorder %s18, 1
    %p146 = por %p144, %p145
    %p148 = scmp.ne.s32.totalorder %s133, %s147
    %p149 = scmp.eq.s32.totalorder %s18, 0
    %p150 = por %p148, %p149
    %s151 = ssub.s32 %s12, %s19
    %p152 = scmp.eq.s32.totalorder %s151, 0
    %s154 = sadd.s32 %s153, 1
    %s155 = scalar_select %p152, %s153, %s154
    %p158 = pneg %p152
    %p159 = scmp.eq.s32.totalorder %s12, 1
    %p160 = por %p158, %p159
    %p161 = scmp.ne.s32.totalorder %s153, %s156
    %p162 = scmp.eq.s32.totalorder %s12, 0
    %p163 = por %p161, %p162
    %p164 = scmp.ne.s32.totalorder %s153, %s156
    %p165 = scmp.eq.s32.totalorder %s17, 1
    %p166 = por %p164, %p165
    %p167 = scmp.ne.s32.totalorder %s156, %s157
    %p168 = scmp.eq.s32.totalorder %s17, 0
    %p169 = por %p167, %p168
    %p170 = scmp.ne.s32.totalorder %s156, %s157
    %p171 = scmp.eq.s32.totalorder %s18, 1
    %p172 = por %p170, %p171
    %p174 = scmp.ne.s32.totalorder %s157, %s173
    %p175 = scmp.eq.s32.totalorder %s18, 0
    %p176 = por %p174, %p175
    %p177 = scmp.le.s32.totalorder 1, %s12
    %p178 = scmp.lt.s32.totalorder %s12, 3
    %p179 = pnand %p177, %p178
    %p180 = pneg %p179
    // Predicated region
    $region9: #{transition_block_2d.1} parent=5 // pred_check
      _
    $region10: #{transition_block_2d.1} parent=5 // pred_check_branch
      %182 = sbr.rel (%p179) target = $region12
    $region11: #{transition_block_2d.1} parent=5 // pred_region
      %s183 = ssub.s32 %s12, 1
      // Predicated region
      $region13: #{transition_block_2d.1} parent=11 // pred_check
        %p184 = pneg %p59
      $region14: #{transition_block_2d.1} parent=11 // pred_check_branch
        %186 = sbr.rel (%p184) target = $region16
      $region15: #{transition_block_2d.1} parent=11 // pred_region
        _
      $region16: #{transition_block_2d.1} parent=11 // pred_fallthru
        _
      // Predicated region
      $region17: #{transition_block_2d.1} parent=11 // pred_check
        %p187 = pneg %p80
      $region18: #{transition_block_2d.1} parent=11 // pred_check_branch
        %189 = sbr.rel (%p187) target = $region20
      $region19: #{transition_block_2d.1} parent=11 // pred_region
        _
      $region20: #{transition_block_2d.1} parent=11 // pred_fallthru
        _
      // Predicated region
      $region21: #{transition_block_2d.1} parent=11 // pred_check
        %p190 = pneg %p101
      $region22: #{transition_block_2d.1} parent=11 // pred_check_branch
        %192 = sbr.rel (%p190) target = $region24
      $region23: #{transition_block_2d.1} parent=11 // pred_region
        _
      $region24: #{transition_block_2d.1} parent=11 // pred_fallthru
        _
      // Predicated region
      $region25: #{transition_block_2d.1} parent=11 // pred_check
        %p193 = pneg %p122
      $region26: #{transition_block_2d.1} parent=11 // pred_check_branch
        %195 = sbr.rel (%p193) target = $region28
      $region27: #{transition_block_2d.1} parent=11 // pred_region
        _
      $region28: #{transition_block_2d.1} parent=11 // pred_fallthru
        _
      // Predicated region
      $region29: #{transition_block_2d.1} parent=11 // pred_check
        %p196 = pneg %p143
      $region30: #{transition_block_2d.1} parent=11 // pred_check_branch
        %198 = sbr.rel (%p196) target = $region32
      $region31: #{transition_block_2d.1} parent=11 // pred_region
        _
      $region32: #{transition_block_2d.1} parent=11 // pred_fallthru
        _
    $region12: #{transition_block_2d.1} parent=5 // pred_fallthru
      _
    %p199 = scmp.lt.s32.totalorder %s12, 2
    // Predicated region
    $region33: #{transition_block_2d.1} parent=5 // pred_check
      %p200 = pneg %p199
    $region34: #{transition_block_2d.1} parent=5 // pred_check_branch
      %202 = sbr.rel (%p200) target = $region36
    $region35: #{transition_block_2d.1} parent=5 // pred_region
      // Predicated region
      $region37: #{transition_block_2d.1} parent=35 // pred_check
        %p203 = pneg %p32
      $region38: #{transition_block_2d.1} parent=35 // pred_check_branch
        %205 = sbr.rel (%p203) target = $region40
      $region39: #{transition_block_2d.1} parent=35 // pred_region
        %p206 = scmp.lt.s32.totalorder %s12, 1
        %s207 = scalar_select %p206, %s12, 1
        %s208 = smul.addr %s207, 2
        %s209 = smul.addr %s208, 4
        %s210 = scalar_lea.vmem %s0, %s209
      $region40: #{transition_block_2d.1} parent=35 // pred_fallthru
        _
    $region36: #{transition_block_2d.1} parent=5 // pred_fallthru
      _
    %p211 = scmp.le.s32.totalorder 1, %s12
    %p212 = scmp.lt.s32.totalorder %s12, 3
    %p213 = pnand %p211, %p212
    %p214 = pneg %p213
    // Predicated region
    $region41: #{transition_block_2d.1} parent=5 // pred_check
      _
    $region42: #{transition_block_2d.1} parent=5 // pred_check_branch
      %216 = sbr.rel (%p213) target = $region44
    $region43: #{transition_block_2d.1} parent=5 // pred_region
      %s217 = ssub.s32 %s12, 1
      %p218 = scmp.lt.s32.totalorder %s17, 1
      %s219 = scalar_select %p218, %s17, 1
      %s220 = smul.addr %s219, 2
      %s221 = smul.addr %s220, 4
      %s222 = scalar_lea.vmem %s0, %s221
      %p223 = pneg %p38
      %p224 = pneg %p35
      %p225 = pneg %p59
      %p226 = pneg %p56
      %p227 = pneg %p80
      %p228 = pneg %p77
      %p229 = pneg %p101
      %p230 = pneg %p98
      %p231 = pneg %p122
      %p232 = pneg %p119
      %p233 = pneg %p143
      %p234 = pneg %p140
      %p235 = pneg %p169
      %p236 = pneg %p166
      %p237 = scmp.lt.s32.totalorder %s17, 1
      %s238 = scalar_select %p237, %s17, 1
      %s239 = smul.addr %s238, 8
      %s240 = scalar_lea.vmem %s6, %s239
      %p241 = scmp.lt.s32.totalorder %s17, 1
      %s242 = scalar_select %p241, %s17, 1
      %s243 = smul.addr %s242, 2
      %s244 = smul.addr %s243, 4
      %s245 = scalar_lea.vmem %s0, %s244
      %p246 = scmp.lt.s32.totalorder %s17, 1
      %s247 = scalar_select %p246, %s17, 1
      %s248 = smul.addr %s247, 8
      %s249 = scalar_lea.vmem %s6, %s248
      %v250 = vld [vmem:[%s245] sm:$0xff]
      %v251 = vld [vmem:[%s1] sm:$0xf]
      %253 = vset.pattern.permute.xlu0 0
      %254 = vperm.xlu0 %253, %v251
      %v255 = vpop.permute.xlu0 %254
      %v257 = vunpack.c.l.s4 839922192
      %v258 = vunpack.c.0.s8 %v257
      %v259 = vlaneseq
      %v260 = vshrl.u32 %v259, 7
      %v261 = vsub.s32 %v258, %v260
      %v262 = vrot.slane %v255, %v261
      %v264 = vmul.f32 %v250, %v262
      %v265 = vld [vmem:[%s2] sm:$0xf]
      %267 = vset.pattern.permute.xlu0 0
      %268 = vperm.xlu0 %267, %v265
      %v269 = vpop.permute.xlu0 %268
      %v271 = vunpack.c.l.s4 839922192
      %v272 = vunpack.c.0.s8 %v271
      %v273 = vlaneseq
      %v274 = vshrl.u32 %v273, 7
      %v275 = vsub.s32 %v272, %v274
      %v276 = vrot.slane %v269, %v275
      %v278 = vadd.f32 %v264, %v276
      %v279 = vmax.f32 %v278, 0.0
      %v280 = vld [vmem:[%s3] sm:$0xff]
      %v281 = vld [vmem:[%s3 + $0x8] sm:$0xff]
      %v282 = vld [vmem:[%s3 + $0x10] sm:$0xff]
      %v283 = vld [vmem:[%s3 + $0x18] sm:$0xff]
      %v284 = vld [vmem:[%s3 + $0x20] sm:$0xff]
      %v285 = vld [vmem:[%s3 + $0x28] sm:$0xff]
      %v286 = vld [vmem:[%s3 + $0x30] sm:$0xff]
      %v287 = vld [vmem:[%s3 + $0x38] sm:$0xff]
      %v288 = vld [vmem:[%s3 + $0x40] sm:$0xff]
      %v289 = vld [vmem:[%s3 + $0x48] sm:$0xff]
      %v290 = vld [vmem:[%s3 + $0x50] sm:$0xff]
      %v291 = vld [vmem:[%s3 + $0x58] sm:$0xff]
      %v292 = vld [vmem:[%s3 + $0x60] sm:$0xff]
      %v293 = vld [vmem:[%s3 + $0x68] sm:$0xff]
      %v294 = vld [vmem:[%s3 + $0x70] sm:$0xff]
      %v295 = vld [vmem:[%s3 + $0x78] sm:$0xff]
      %v296 = vld [vmem:[%s3 + $0x80] sm:$0xff]
      %v297 = vld [vmem:[%s3 + $0x88] sm:$0xff]
      %v298 = vld [vmem:[%s3 + $0x90] sm:$0xff]
      %v299 = vld [vmem:[%s3 + $0x98] sm:$0xff]
      %v300 = vld [vmem:[%s3 + $0xa0] sm:$0xff]
      %v301 = vld [vmem:[%s3 + $0xa8] sm:$0xff]
      %v302 = vld [vmem:[%s3 + $0xb0] sm:$0xff]
      %v303 = vld [vmem:[%s3 + $0xb8] sm:$0xff]
      %v304 = vld [vmem:[%s3 + $0xc0] sm:$0xff]
      %v305 = vld [vmem:[%s3 + $0xc8] sm:$0xff]
      %v306 = vld [vmem:[%s3 + $0xd0] sm:$0xff]
      %v307 = vld [vmem:[%s3 + $0xd8] sm:$0xff]
      %v308 = vld [vmem:[%s3 + $0xe0] sm:$0xff]
      %v309 = vld [vmem:[%s3 + $0xe8] sm:$0xff]
      %v310 = vld [vmem:[%s3 + $0xf0] sm:$0xff]
      %v311 = vld [vmem:[%s3 + $0xf8] sm:$0xff]
      %v313 = vcombine.high %v279, %v279
      %315 = vmatprep.subr.mxu0 0.0
      %316 = vmatpush1.msra.mxu0 %v295
      %317 = vmatprep.subr.mxu0 0.0
      %318 = vmatpush1.msra.mxu0 %v294
      %319 = vmatprep.subr.mxu0 0.0
      %320 = vmatpush1.msra.mxu0 %v293
      %321 = vmatprep.subr.mxu0 0.0
      %322 = vmatpush1.msra.mxu0 %v292
      %323 = vmatprep.subr.mxu0 0.0
      %324 = vmatpush1.msra.mxu0 %v291
      %325 = vmatprep.subr.mxu0 0.0
      %326 = vmatpush1.msra.mxu0 %v290
      %327 = vmatprep.subr.mxu0 0.0
      %328 = vmatpush1.msra.mxu0 %v289
      %329 = vmatprep.subr.mxu0 0.0
      %330 = vmatpush1.msra.mxu0 %v288
      %331 = vmatprep.subr.mxu0 0.0
      %332 = vmatpush1.msra.mxu0 %v287
      %333 = vmatprep.subr.mxu0 0.0
      %334 = vmatpush1.msra.mxu0 %v286
      %335 = vmatprep.subr.mxu0 0.0
      %336 = vmatpush1.msra.mxu0 %v285
      %337 = vmatprep.subr.mxu0 0.0
      %338 = vmatpush1.msra.mxu0 %v284
      %339 = vmatprep.subr.mxu0 0.0
      %340 = vmatpush1.msra.mxu0 %v283
      %341 = vmatprep.subr.mxu0 0.0
      %342 = vmatpush1.msra.mxu0 %v282
      %343 = vmatprep.subr.mxu0 0.0
      %344 = vmatpush1.msra.mxu0 %v281
      %345 = vmatprep.subr.mxu0 0.0
      %346 = vmatpush1.msra.mxu0 %v280
      %347 = vmatprep.subr.mxu0 0.0
      %348 = vmatpush2.msra.mxu0 %v311
      %349 = vmatprep.subr.mxu0 0.0
      %350 = vmatpush2.msra.mxu0 %v310
      %351 = vmatprep.subr.mxu0 0.0
      %352 = vmatpush2.msra.mxu0 %v309
      %353 = vmatprep.subr.mxu0 0.0
      %354 = vmatpush2.msra.mxu0 %v308
      %355 = vmatprep.subr.mxu0 0.0
      %356 = vmatpush2.msra.mxu0 %v307
      %357 = vmatprep.subr.mxu0 0.0
      %358 = vmatpush2.msra.mxu0 %v306
      %359 = vmatprep.subr.mxu0 0.0
      %360 = vmatpush2.msra.mxu0 %v305
      %361 = vmatprep.subr.mxu0 0.0
      %362 = vmatpush2.msra.mxu0 %v304
      %363 = vmatprep.subr.mxu0 0.0
      %364 = vmatpush2.msra.mxu0 %v303
      %365 = vmatprep.subr.mxu0 0.0
      %366 = vmatpush2.msra.mxu0 %v302
      %367 = vmatprep.subr.mxu0 0.0
      %368 = vmatpush2.msra.mxu0 %v301
      %369 = vmatprep.subr.mxu0 0.0
      %370 = vmatpush2.msra.mxu0 %v300
      %371 = vmatprep.subr.mxu0 0.0
      %372 = vmatpush2.msra.mxu0 %v299
      %373 = vmatprep.subr.mxu0 0.0
      %374 = vmatpush2.msra.mxu0 %v298
      %375 = vmatprep.subr.mxu0 0.0
      %376 = vmatpush2.msra.mxu0 %v297
      %377 = vmatprep.subr.mxu0 0.0
      %378 = vmatpush2.msra.mxu0 %v296
      %379 = vmatprep.mubr.f32.mxu0 %v313
      %380 = vmatmul.mubr.f32.gmra.mxu0 %v279
      %v381 = vpop.f32.mrf.mxu0
      %v382 = vadd.f32 0.0, %v381
      %v383 = vpop.f32.mrf.mxu0
      %384 = vdwg.mxu0
      %v385 = vld [vmem:[%s4] sm:$0xff]
      %v386 = vld [vmem:[%s5] sm:$0xff]
      %388 = vset.pattern.permute.xlu0 0
      %389 = vperm.xlu0 %388, %v386
      %v390 = vpop.permute.xlu0 %389
      %vm392 = vcmask 31744
      %v394 = vsel %vm392, %v385, 0
      %vm396 = vcmask 1043456
      %v398 = vsel %vm396, %v382, 0
      %400 = vmatprep.subr.mxu0 0.0
      %401 = vmatpush1.msra.mxu0 0.0
      %402 = vmatprep.subr.mxu0 0.0
      %403 = vmatpush1.msra.mxu0 0.0
      %404 = vmatprep.subr.mxu0 0.0
      %405 = vmatpush1.msra.mxu0 0.0
      %406 = vmatprep.subr.mxu0 0.0
      %407 = vmatpush1.msra.mxu0 0.0
      %408 = vmatprep.subr.mxu0 0.0
      %409 = vmatpush1.msra.mxu0 0.0
      %410 = vmatprep.subr.mxu0 0.0
      %411 = vmatpush1.msra.mxu0 0.0
      %412 = vmatprep.subr.mxu0 0.0
      %413 = vmatpush1.msra.mxu0 0.0
      %414 = vmatprep.subr.mxu0 0.0
      %415 = vmatpush1.msra.mxu0 0.0
      %416 = vmatprep.subr.mxu0 0.0
      %417 = vmatpush1.msra.mxu0 0.0
      %418 = vmatprep.subr.mxu0 0.0
      %419 = vmatpush1.msra.mxu0 0.0
      %420 = vmatprep.subr.mxu0 0.0
      %421 = vmatpush1.msra.mxu0 0.0
      %422 = vmatprep.subr.mxu0 0.0
      %423 = vmatpush1.msra.mxu0 0.0
      %424 = vmatprep.subr.mxu0 0.0
      %425 = vmatpush1.msra.mxu0 0.0
      %426 = vmatprep.subr.mxu0 0.0
      %427 = vmatpush1.msra.mxu0 0.0
      %428 = vmatprep.subr.mxu0 0.0
      %429 = vmatpush1.msra.mxu0 0.0
      %430 = vmatprep.subr.mxu0 0.0
      %431 = vmatpush1.msra.mxu0 %v398
      %432 = vmatprep.subr.mxu0 0.0
      %433 = vmatpush2.msra.mxu0 0.0
      %434 = vmatprep.subr.mxu0 0.0
      %435 = vmatpush2.msra.mxu0 0.0
      %436 = vmatprep.subr.mxu0 0.0
      %437 = vmatpush2.msra.mxu0 0.0
      %438 = vmatprep.subr.mxu0 0.0
      %439 = vmatpush2.msra.mxu0 0.0
      %440 = vmatprep.subr.mxu0 0.0
      %441 = vmatpush2.msra.mxu0 0.0
      %442 = vmatprep.subr.mxu0 0.0
      %443 = vmatpush2.msra.mxu0 0.0
      %444 = vmatprep.subr.mxu0 0.0
      %445 = vmatpush2.msra.mxu0 0.0
      %446 = vmatprep.subr.mxu0 0.0
      %447 = vmatpush2.msra.mxu0 0.0
      %448 = vmatprep.subr.mxu0 0.0
      %449 = vmatpush2.msra.mxu0 0.0
      %450 = vmatprep.subr.mxu0 0.0
      %451 = vmatpush2.msra.mxu0 0.0
      %452 = vmatprep.subr.mxu0 0.0
      %453 = vmatpush2.msra.mxu0 0.0
      %454 = vmatprep.subr.mxu0 0.0
      %455 = vmatpush2.msra.mxu0 0.0
      %456 = vmatprep.subr.mxu0 0.0
      %457 = vmatpush2.msra.mxu0 0.0
      %458 = vmatprep.subr.mxu0 0.0
      %459 = vmatpush2.msra.mxu0 0.0
      %460 = vmatprep.subr.mxu0 0.0
      %461 = vmatpush2.msra.mxu0 0.0
      %462 = vmatprep.subr.mxu0 0.0
      %463 = vmatpush2.msra.mxu0 0.0
      %464 = vmatprep.mubr.f32.mxu0 0.0
      %465 = vmatmul.mubr.f32.gmra.mxu0 %v394
      %v466 = vpop.f32.mrf.mxu0
      %v467 = vadd.f32 %v390, %v466
      %v468 = vpop.f32.mrf.mxu0
      %469 = vdwg.mxu0
      %vm470 = vcmask 400384
      %471 = vst.msk [vmem:[%s249] sm:$0xff] %vm470, %v467
      %p472 = scmp.lt.s32.totalorder %s17, 1
      %s473 = scalar_select %p472, %s17, 1
      %s474 = smul.addr %s473, 8
      %s475 = scalar_lea.vmem %s6, %s474
      // Predicated region
      $region45: #{transition_block_2d.1} parent=43 // pred_check
        %p476 = pneg %p166
      $region46: #{transition_block_2d.1} parent=43 // pred_check_branch
        %478 = sbr.rel (%p476) target = $region48
      $region47: #{transition_block_2d.1} parent=43 // pred_region
        _
      $region48: #{transition_block_2d.1} parent=43 // pred_fallthru
        _
    $region44: #{transition_block_2d.1} parent=5 // pred_fallthru
      _
    %p479 = scmp.le.s32.totalorder 2, %s12
    // Predicated region
    $region49: #{transition_block_2d.1} parent=5 // pred_check
      %p480 = pneg %p479
    $region50: #{transition_block_2d.1} parent=5 // pred_check_branch
      %482 = sbr.rel (%p480) target = $region52
    $region51: #{transition_block_2d.1} parent=5 // pred_region
      %s483 = ssub.s32 %s12, 2
      // Predicated region
      $region53: #{transition_block_2d.1} parent=51 // pred_check
        %p484 = pneg %p172
      $region54: #{transition_block_2d.1} parent=51 // pred_check_branch
        %486 = sbr.rel (%p484) target = $region56
      $region55: #{transition_block_2d.1} parent=51 // pred_region
        %p487 = scmp.lt.s32.totalorder %s18, 1
        %s488 = scalar_select %p487, %s18, 1
        %s489 = smul.addr %s488, 8
        %s490 = scalar_lea.vmem %s6, %s489
      $region56: #{transition_block_2d.1} parent=51 // pred_fallthru
        _
    $region52: #{transition_block_2d.1} parent=5 // pred_fallthru
      _
  $region6: #{transition_block_2d.1} parent=0 // loop_footer
    %s16 = sadd.s32 1, %s12
  $region7: #{transition_block_2d.1} parent=0 // loop_footer_branch
    %11 = sbr.rel target = $region3
  $region8: #{transition_block_2d.1} parent=0 // loop_exit
    _

</llo_original>
